<compile_context>
chip_gen: v7x
topology: tpu7x:2x2x1
jax: 0.10.0
libtpu: 0.0.40
codegen_flags: <defaults>
</compile_context>

<pallas_src>
import jax
import jax.numpy as jnp
from jax.experimental import pallas as pl
from jax.experimental.pallas import tpu as pltpu


def _round_up(x, m):
    return ((x + m - 1) // m) * m


def _tpu_generation():
    try:
        kind = jax.devices()[0].device_kind.lower()
    except Exception:
        return 0
    for g in (7, 6, 5, 4, 3, 2):
        if f"v{g}" in kind:
            return g
    return 0


def linear_head_kernel(x_ref, w_ref, b_ref, out_ref):
    # x_ref:   [TB, D]      bf16/f32  batch tile of backbone features
    # w_ref:   [D, C_pad]   bf16/f32  resident, lane-padded classifier weight
    # b_ref:   [1, C_pad]   f32       resident bias (zero in padded lanes)
    # out_ref: [TB, C_pad]  f32       lane-dense logits slab (single output)
    out_ref[...] = (
        jnp.dot(x_ref[...], w_ref[...], preferred_element_type=jnp.float32)
        + b_ref[...]
    )


def prepare_classifier_params(weight, bias, *, compute_dtype=jnp.bfloat16,
                              lane_align=None):
    """One-time parameter prep (hoisted out of the per-call forward path).

    weight: [C, D] (nn.Linear layout), bias: [C].
    Returns lane-padded, transposed, compute-dtype weight + f32 bias.
    """
    C, D = weight.shape
    if lane_align is None:
        # 256-wide MXU on v6e/v7x; 128 lanes on v5e and older.
        lane_align = 256 if _tpu_generation() >= 6 else 128
    C_pad = _round_up(C, lane_align)
    w_pad = jnp.zeros((D, C_pad), dtype=compute_dtype)
    w_pad = w_pad.at[:, :C].set(jnp.transpose(weight).astype(compute_dtype))
    b_pad = jnp.zeros((1, C_pad), dtype=jnp.float32)
    b_pad = b_pad.at[0, :C].set(bias.astype(jnp.float32))
    return {"w_pad": w_pad, "b_pad": b_pad, "num_classes": C}


def _pick_batch_tile(batch, *, min_steps=4, max_tb=512):
    # Multiple of 16 (bf16 sublane packing); keep >= min_steps grid steps so
    # v7x megacore can shard the batch and DMA/compute overlap exists.
    tb = _round_up(pl.cdiv(batch, min_steps), 16)
    return max(16, min(max_tb, tb))


def _build_call(grid_b, tb, D, C_pad, vmem_limit_bytes, single_buffer_weights):
    resident_kwargs = {}
    if single_buffer_weights:
        # Constant index_map => double-buffering the resident weight/bias is
        # pure VMEM waste; request a single buffer.
        resident_kwargs = dict(pipeline_mode=pl.Buffered(1))
    return pl.pallas_call(
        linear_head_kernel,
        out_shape=jax.ShapeDtypeStruct((grid_b * tb, C_pad), jnp.float32),
        grid=(grid_b,),
        in_specs=[
            pl.BlockSpec((tb, D), lambda i: (i, 0)),                      # batch-tiled
            pl.BlockSpec((D, C_pad), lambda i: (0, 0), **resident_kwargs),  # resident W
            pl.BlockSpec((1, C_pad), lambda i: (0, 0), **resident_kwargs),  # resident b
        ],
        out_specs=pl.BlockSpec((tb, C_pad), lambda i: (i, 0)),
        compiler_params=pltpu.CompilerParams(
            dimension_semantics=("parallel",),   # megacore-shard the batch
            vmem_limit_bytes=vmem_limit_bytes,
        ),
    )


def custom_resnet_forward(features, weight, bias, *, params=None,
                          compute_dtype=jnp.bfloat16):
    """Pallas equivalent of CustomResNet.forward on pre-extracted features.

    Returns (logits, features, classifier_weight), matching the PyTorch module.
    """
    if params is None:
        params = prepare_classifier_params(weight, bias, compute_dtype=compute_dtype)
    w_pad, b_pad, C = params["w_pad"], params["b_pad"], params["num_classes"]
    B, D = features.shape
    C_pad = w_pad.shape[1]

    gen = _tpu_generation()
    if gen >= 7:
        vmem_limit, max_tb = 48 * 1024 * 1024, 512     # 64 MiB physical VMEM
    elif gen in (5, 6):
        vmem_limit, max_tb = 96 * 1024 * 1024, 1024    # 128 MiB physical VMEM
    else:
        vmem_limit, max_tb = None, 256                 # leave compiler default

    tb = _pick_batch_tile(B, min_steps=4, max_tb=max_tb)
    B_pad = _round_up(B, tb)

    x = features.astype(compute_dtype)
    if B_pad != B:
        x = jnp.zeros((B_pad, D), dtype=compute_dtype).at[:B].set(x)

    def run(single_buffer_weights):
        call = _build_call(B_pad // tb, tb, D, C_pad, vmem_limit,
                           single_buffer_weights)
        return call(x, w_pad, b_pad)

    try:
        logits_pad = run(True)
    except Exception:
        # Fallback for JAX builds without BlockSpec(pipeline_mode=...): default
        # double-buffered resident weights (correctness unchanged).
        logits_pad = run(False)

    logits = logits_pad[:B, :C]
    return logits, features, weight


def custom_resnet_reference(features, weight, bias):
    """Pure-JAX reference mirroring the PyTorch forward (classifier head)."""
    logits = features @ weight.T + bias
    return logits, features, weight


if __name__ == "__main__":
    # Small stand-ins for (batch, resnet50 features_dim=2048, num_classes=7).
    B, D, C = 64, 256, 7

    key = jax.random.PRNGKey(0)
    kx, kw, kb = jax.random.split(key, 3)
    features = jax.random.normal(kx, (B, D), dtype=jnp.float32)
    weight = 0.05 * jax.random.normal(kw, (C, D), dtype=jnp.float32)  # nn.Linear [C, D]
    bias = 0.05 * jax.random.normal(kb, (C,), dtype=jnp.float32)

    ref_logits, ref_feats, ref_w = custom_resnet_reference(features, weight, bias)

    # f32 compute path: tight check of kernel / tiling / padding logic.
    out_f32 = custom_resnet_forward(features, weight, bias, compute_dtype=jnp.float32)
    out_f32 = jax.block_until_ready(out_f32)
    assert out_f32[0].shape == (B, C), out_f32[0].shape
    assert jnp.allclose(out_f32[0], ref_logits, atol=1e-5, rtol=1e-5)
    assert jnp.allclose(out_f32[1], ref_feats)
    assert jnp.allclose(out_f32[2], ref_w)

    # bf16 compute path (production config per the performance review).
    out_bf16 = custom_resnet_forward(features, weight, bias, compute_dtype=jnp.bfloat16)
    out_bf16 = jax.block_until_ready(out_bf16)
    assert out_bf16[0].shape == (B, C), out_bf16[0].shape
    assert jnp.allclose(out_bf16[0], ref_logits, atol=5e-2, rtol=5e-2)

    print("KERNEL_OK")
</pallas_src>

<mosaic_0001>
module attributes {stable_mosaic.version = 11 : i64} {
  func.func @linear_head_kernel(%arg0: i32, %arg1: memref<16x256xf32, #tpu.memory_space<vmem>>, %arg2: memref<256x128xf32, #tpu.memory_space<vmem>>, %arg3: memref<1x128xf32, #tpu.memory_space<vmem>>, %arg4: memref<16x128xf32, #tpu.memory_space<vmem>>) attributes {dimension_semantics = [#tpu.dimension_semantics<parallel>], iteration_bounds = array<i64: 4>, scalar_prefetch = 0 : i64, scratch_operands = 0 : i64, tpu.core_type = #tpu.core_type<tc>, window_params = [{transform_indices = @transform_0, window_bounds = array<i64: 16, 256>}, {pipeline_mode = #tpu.pipeline_mode<synchronous>, transform_indices = @transform_1, window_bounds = array<i64: 256, 128>}, {pipeline_mode = #tpu.pipeline_mode<synchronous>, transform_indices = @transform_2, window_bounds = array<i64: 1, 128>}, {transform_indices = @transform_3, window_bounds = array<i64: 16, 128>}]} {
    %c0 = arith.constant 0 : index
    %c0_0 = arith.constant 0 : index
    %0 = vector.load %arg1[%c0, %c0_0] : memref<16x256xf32, #tpu.memory_space<vmem>>, vector<16x256xf32>
    %c0_1 = arith.constant 0 : index
    %c0_2 = arith.constant 0 : index
    %1 = vector.load %arg2[%c0_1, %c0_2] : memref<256x128xf32, #tpu.memory_space<vmem>>, vector<256x128xf32>
    %cst = arith.constant dense<0.000000e+00> : vector<16x128xf32>
    %2 = tpu.matmul %0, %1, %cst {dimension_numbers = #tpu.dot_dimension_numbers<[1], [0], [0], [1], [0, 0, 1, 1], [], []>} : vector<16x256xf32>, vector<256x128xf32>, vector<16x128xf32> -> vector<16x128xf32>
    %c0_3 = arith.constant 0 : index
    %c0_4 = arith.constant 0 : index
    %3 = vector.load %arg3[%c0_3, %c0_4] : memref<1x128xf32, #tpu.memory_space<vmem>>, vector<1x128xf32>
    %4 = vector.broadcast %3 : vector<1x128xf32> to vector<16x128xf32>
    %5 = arith.addf %2, %4 : vector<16x128xf32>
    %c0_5 = arith.constant 0 : index
    %c0_6 = arith.constant 0 : index
    %6 = vector.load %arg4[%c0_5, %c0_6] : memref<16x128xf32, #tpu.memory_space<vmem>>, vector<16x128xf32>
    tpu.vector_store %arg4[%c0_5, %c0_6], %5 {strides = array<i32>} : memref<16x128xf32, #tpu.memory_space<vmem>>, vector<16x128xf32>,
    return
  }
  func.func @transform_0(%arg0: i32) -> (i32, i32) {
    %c0_i32 = arith.constant 0 : i32
    %c0_i32_0 = arith.constant 0 : i32
    return %arg0, %c0_i32 : i32, i32
  }
  func.func @transform_1(%arg0: i32) -> (i32, i32) {
    %c0_i32 = arith.constant 0 : i32
    %c0_i32_0 = arith.constant 0 : i32
    %c0_i32_1 = arith.constant 0 : i32
    return %c0_i32, %c0_i32_0 : i32, i32
  }
  func.func @transform_2(%arg0: i32) -> (i32, i32) {
    %c0_i32 = arith.constant 0 : i32
    %c0_i32_0 = arith.constant 0 : i32
    %c0_i32_1 = arith.constant 0 : i32
    return %c0_i32, %c0_i32_0 : i32, i32
  }
  func.func @transform_3(%arg0: i32) -> (i32, i32) {
    %c0_i32 = arith.constant 0 : i32
    %c0_i32_0 = arith.constant 0 : i32
    return %arg0, %c0_i32 : i32, i32
  }
}

module attributes {stable_mosaic.version = 11 : i64} {
  func.func @linear_head_kernel(%arg0: i32, %arg1: memref<16x256xf32, #tpu.memory_space<vmem>>, %arg2: memref<256x128xf32, #tpu.memory_space<vmem>>, %arg3: memref<1x128xf32, #tpu.memory_space<vmem>>, %arg4: memref<16x128xf32, #tpu.memory_space<vmem>>) attributes {dimension_semantics = [#tpu.dimension_semantics<parallel>], iteration_bounds = array<i64: 4>, scalar_prefetch = 0 : i64, scratch_operands = 0 : i64, tpu.core_type = #tpu.core_type<tc>, window_params = [{transform_indices = @transform_0, window_bounds = array<i64: 16, 256>}, {pipeline_mode = #tpu.pipeline_mode<synchronous>, transform_indices = @transform_1, window_bounds = array<i64: 256, 128>}, {pipeline_mode = #tpu.pipeline_mode<synchronous>, transform_indices = @transform_2, window_bounds = array<i64: 1, 128>}, {transform_indices = @transform_3, window_bounds = array<i64: 16, 128>}]} {
    %c0 = arith.constant 0 : index
    %c0_0 = arith.constant 0 : index
    %0 = vector.load %arg1[%c0, %c0_0] : memref<16x256xf32, #tpu.memory_space<vmem>>, vector<16x256xf32>
    %c0_1 = arith.constant 0 : index
    %c0_2 = arith.constant 0 : index
    %1 = vector.load %arg2[%c0_1, %c0_2] : memref<256x128xf32, #tpu.memory_space<vmem>>, vector<256x128xf32>
    %cst = arith.constant dense<0.000000e+00> : vector<16x128xf32>
    %2 = tpu.matmul %0, %1, %cst {dimension_numbers = #tpu.dot_dimension_numbers<[1], [0], [0], [1], [0, 0, 1, 1], [], []>} : vector<16x256xf32>, vector<256x128xf32>, vector<16x128xf32> -> vector<16x128xf32>
    %c0_3 = arith.constant 0 : index
    %c0_4 = arith.constant 0 : index
    %3 = vector.load %arg3[%c0_3, %c0_4] : memref<1x128xf32, #tpu.memory_space<vmem>>, vector<1x128xf32>
    %4 = vector.broadcast %3 : vector<1x128xf32> to vector<16x128xf32>
    %5 = arith.addf %2, %4 : vector<16x128xf32>
    %c0_5 = arith.constant 0 : index
    %c0_6 = arith.constant 0 : index
    %6 = vector.load %arg4[%c0_5, %c0_6] : memref<16x128xf32, #tpu.memory_space<vmem>>, vector<16x128xf32>
    tpu.vector_store %arg4[%c0_5, %c0_6], %5 {strides = array<i32>} : memref<16x128xf32, #tpu.memory_space<vmem>>, vector<16x128xf32>,
    return
  }
  func.func @transform_0(%arg0: i32) -> (i32, i32) {
    %c0_i32 = arith.constant 0 : i32
    %c0_i32_0 = arith.constant 0 : i32
    return %arg0, %c0_i32 : i32, i32
  }
  func.func @transform_1(%arg0: i32) -> (i32, i32) {
    %c0_i32 = arith.constant 0 : i32
    %c0_i32_0 = arith.constant 0 : i32
    %c0_i32_1 = arith.constant 0 : i32
    return %c0_i32, %c0_i32_0 : i32, i32
  }
  func.func @transform_2(%arg0: i32) -> (i32, i32) {
    %c0_i32 = arith.constant 0 : i32
    %c0_i32_0 = arith.constant 0 : i32
    %c0_i32_1 = arith.constant 0 : i32
    return %c0_i32, %c0_i32_0 : i32, i32
  }
  func.func @transform_3(%arg0: i32) -> (i32, i32) {
    %c0_i32 = arith.constant 0 : i32
    %c0_i32_0 = arith.constant 0 : i32
    return %arg0, %c0_i32 : i32, i32
  }
}

</mosaic_0001>

<llo_original>
// kernel: tpu_custom_call.1
$region0: #{tpu_custom_call.1}
  #allocation0 [shape = 'u32[]', space=smem, size = 0x4, offset = 0x4, fixed_abs, tag = 'smem constant byte address 0x4 - core index']
  #allocation1 [shape = 'u32[144,128]{1,0:T(1,128)}', space=vmem, size = 0x12000, scoped, tag = 'internal scratch']
  %s0 = inlined_call_operand.hbm [shape: f32[64,256], index: 0, kind: input, shape index: {}]
  %s1 = inlined_call_operand.hbm [shape: f32[256,128], index: 1, kind: input, shape index: {}]
  %s2 = inlined_call_operand.vmem [shape: f32[1,128], index: 2, kind: input, shape index: {}]
  %s3 = inlined_call_operand.hbm [shape: f32[64,128], index: 3, kind: output, shape index: {}]
  %s4 = sld [smem:[#allocation0]]
  $region53: #{tpu_custom_call.1} parent=0
    _
  %s6 = ssub.s32 1, %s4
  %s7 = scalar_select 0, %s6, %s4
  $region1: #{tpu_custom_call.1} parent=0
    #allocation2 [shape = 'u8[32768]{0}', space=vmem, size = 0x8000, scoped, tag = 'input window, operand 0']
    #allocation3 [shape = 's32[2]{0}', space=sflag, size = 0x8, scoped, tag = 'scoped memory for tpu_custom_call.1']
    #allocation4 [shape = 's32[2]{0}', space=sflag, size = 0x8, scoped, tag = 'scoped memory for tpu_custom_call.1']
    #allocation5 [shape = 'u8[131072]{0}', space=vmem, size = 0x20000, scoped, tag = 'input window, operand 1, single buffered']
    #allocation6 [shape = 's32[1]{0}', space=sflag, size = 0x4, scoped, tag = 'scoped memory for tpu_custom_call.1']
    #allocation7 [shape = 'u8[16384]{0}', space=vmem, size = 0x4000, scoped, tag = 'output window, operand 0']
    %8 = vsyncpa [#allocation3], 0
    %s9 = scalar_lea.sflag [#allocation3], 1
    %10 = vsyncpa %s9, 0
    %11 = vsyncpa [#allocation6], 0
    %12 = vsyncpa [#allocation4], 0
    %s13 = scalar_lea.sflag [#allocation4], 1
    %14 = vsyncpa %s13, 0
    loop: start=0, step=1, limit=6
    $region2: #{tpu_custom_call.1} parent=1 // loop_pre_header
      _
    $region3: #{tpu_custom_call.1} parent=1 // loop_header
      %s16 = sphi 0, %s20
      %p17 = scmp.ge.s32.totalorder %s16, 6
      %s26 = sphi 0, %s28
      %s29 = sphi 0, %s26
      %s30 = sphi 0, %s29
      %s46 = sphi 0, %s30
      %s50 = sphi 0, %s50
      %s52 = sphi 0, %s50
      %s53 = sphi 0, %s52
      %s67 = sphi 0, %s53
      %s71 = sphi 0, %s71
      %s73 = sphi 0, %s71
      %s74 = sphi 0, %s73
      %s88 = sphi 0, %s74
      %s94 = sphi 0, %s96
      %s97 = sphi 0, %s94
      %s98 = sphi 0, %s97
      %s114 = sphi 0, %s98
    $region4: #{tpu_custom_call.1} parent=1 // loop_header_branch
      %19 = sbr.rel (%p17) target = $region8
    $region5: #{tpu_custom_call.1} parent=1 // loop_body
      %s21 = ssub.s32 %s16, 1
      %s22 = ssub.s32 %s16, 2
      %s23 = sadd.s32 %s16, 1
      %s24 = ssub.s32 %s16, %s23
      %p25 = scmp.eq.s32.totalorder %s24, 0
      %s27 = sadd.s32 %s26, 1
      %s28 = scalar_select %p25, %s26, %s27
      %p31 = pneg %p25
      %p32 = scmp.eq.s32.totalorder %s16, 3
      %p33 = por %p31, %p32
      %p34 = scmp.ne.s32.totalorder %s26, %s29
      %p35 = scmp.eq.s32.totalorder %s16, 0
      %p36 = por %p34, %p35
      %p37 = scmp.ne.s32.totalorder %s26, %s29
      %p38 = scmp.eq.s32.totalorder %s21, 3
      %p39 = por %p37, %p38
      %p40 = scmp.ne.s32.totalorder %s29, %s30
      %p41 = scmp.eq.s32.totalorder %s21, 0
      %p42 = por %p40, %p41
      %p43 = scmp.ne.s32.totalorder %s29, %s30
      %p44 = scmp.eq.s32.totalorder %s22, 3
      %p45 = por %p43, %p44
      %p47 = scmp.ne.s32.totalorder %s30, %s46
      %p48 = scmp.eq.s32.totalorder %s22, 0
      %p49 = por %p47, %p48
      %s51 = sadd.s32 %s50, 1
      %p54 = scmp.eq.s32.totalorder %s16, 3
      %p55 = scmp.ne.s32.totalorder %s50, %s52
      %p56 = scmp.eq.s32.totalorder %s16, 0
      %p57 = por %p55, %p56
      %p58 = scmp.ne.s32.totalorder %s50, %s52
      %p59 = scmp.eq.s32.totalorder %s21, 3
      %p60 = por %p58, %p59
      %p61 = scmp.ne.s32.totalorder %s52, %s53
      %p62 = scmp.eq.s32.totalorder %s21, 0
      %p63 = por %p61, %p62
      %p64 = scmp.ne.s32.totalorder %s52, %s53
      %p65 = scmp.eq.s32.totalorder %s22, 3
      %p66 = por %p64, %p65
      %p68 = scmp.ne.s32.totalorder %s53, %s67
      %p69 = scmp.eq.s32.totalorder %s22, 0
      %p70 = por %p68, %p69
      %s72 = sadd.s32 %s71, 1
      %p75 = scmp.eq.s32.totalorder %s16, 3
      %p76 = scmp.ne.s32.totalorder %s71, %s73
      %p77 = scmp.eq.s32.totalorder %s16, 0
      %p78 = por %p76, %p77
      %p79 = scmp.ne.s32.totalorder %s71, %s73
      %p80 = scmp.eq.s32.totalorder %s21, 3
      %p81 = por %p79, %p80
      %p82 = scmp.ne.s32.totalorder %s73, %s74
      %p83 = scmp.eq.s32.totalorder %s21, 0
      %p84 = por %p82, %p83
      %p85 = scmp.ne.s32.totalorder %s73, %s74
      %p86 = scmp.eq.s32.totalorder %s22, 3
      %p87 = por %p85, %p86
      %p89 = scmp.ne.s32.totalorder %s74, %s88
      %p90 = scmp.eq.s32.totalorder %s22, 0
      %p91 = por %p89, %p90
      %s92 = ssub.s32 %s16, %s23
      %p93 = scmp.eq.s32.totalorder %s92, 0
      %s95 = sadd.s32 %s94, 1
      %s96 = scalar_select %p93, %s94, %s95
      %p99 = pneg %p93
      %p100 = scmp.eq.s32.totalorder %s16, 3
      %p101 = por %p99, %p100
      %p102 = scmp.ne.s32.totalorder %s94, %s97
      %p103 = scmp.eq.s32.totalorder %s16, 0
      %p104 = por %p102, %p103
      %p105 = scmp.ne.s32.totalorder %s94, %s97
      %p106 = scmp.eq.s32.totalorder %s21, 3
      %p107 = por %p105, %p106
      %p108 = scmp.ne.s32.totalorder %s97, %s98
      %p109 = scmp.eq.s32.totalorder %s21, 0
      %p110 = por %p108, %p109
      %p111 = scmp.ne.s32.totalorder %s97, %s98
      %p112 = scmp.eq.s32.totalorder %s22, 3
      %p113 = por %p111, %p112
      %p115 = scmp.ne.s32.totalorder %s98, %s114
      %p116 = scmp.eq.s32.totalorder %s22, 0
      %p117 = por %p115, %p116
      %p118 = scmp.le.s32.totalorder 1, %s16
      %p119 = scmp.lt.s32.totalorder %s16, 5
      %p120 = pnand %p118, %p119
      %p121 = pneg %p120
      // Predicated region
      $region9: #{tpu_custom_call.1} parent=5 // pred_check
        _
      $region10: #{tpu_custom_call.1} parent=5 // pred_check_branch
        %123 = sbr.rel (%p120) target = $region12
      $region11: #{tpu_custom_call.1} parent=5 // pred_region
        %s124 = ssub.s32 %s16, 1
        // Predicated region
        $region13: #{tpu_custom_call.1} parent=11 // pred_check
          %p125 = pneg %p63
        $region14: #{tpu_custom_call.1} parent=11 // pred_check_branch
          %127 = sbr.rel (%p125) target = $region16
        $region15: #{tpu_custom_call.1} parent=11 // pred_region
          %s129 = ssub.s32 4096, 4096
          %130 = vsyncadd [#allocation6], %s129
          %s131 = sshll.u32 [#allocation5], 4
          %s132 = int_to_ptr.vmem [resolvable:$true] %s131
          %137 = dma.hbm_to_vmem [thread:$0]  %s1, 4096, %s132, [#allocation6], 128, 128, 8
        $region16: #{tpu_custom_call.1} parent=11 // pred_fallthru
          _
        // Predicated region
        $region17: #{tpu_custom_call.1} parent=11 // pred_check
          %p138 = pneg %p84
        $region18: #{tpu_custom_call.1} parent=11 // pred_check_branch
          %140 = sbr.rel (%p138) target = $region20
        $region19: #{tpu_custom_call.1} parent=11 // pred_region
          _
        $region20: #{tpu_custom_call.1} parent=11 // pred_fallthru
          _
      $region12: #{tpu_custom_call.1} parent=5 // pred_fallthru
        _
      %p141 = scmp.lt.s32.totalorder %s16, 4
      // Predicated region
      $region21: #{tpu_custom_call.1} parent=5 // pred_check
        %p142 = pneg %p141
      $region22: #{tpu_custom_call.1} parent=5 // pred_check_branch
        %144 = sbr.rel (%p142) target = $region24
      $region23: #{tpu_custom_call.1} parent=5 // pred_region
        // Predicated region
        $region25: #{tpu_custom_call.1} parent=23 // pred_check
          %p145 = pneg %p36
        $region26: #{tpu_custom_call.1} parent=23 // pred_check_branch
          %147 = sbr.rel (%p145) target = $region28
        $region27: #{tpu_custom_call.1} parent=23 // pred_region
          %s148 = sand.u32 %s26, 1
          %s149 = scalar_lea.sflag [#allocation3], %s148
          %s150 = sand.u32 %s26, 1
          %s151 = smul.addr %s150, 32
          %s152 = scalar_lea.vmem [#allocation2], %s151
          %s153 = smul.u32 2, %s16
          %s155 = ssub.s32 512, 512
          %156 = vsyncadd %s149, %s155
          %s157 = smul.addr %s153, 2
          %s158 = smul.addr %s157, 128
          %s159 = scalar_lea.hbm %s0, %s158
          %s160 = sshll.u32 %s152, 4
          %s161 = int_to_ptr.vmem [resolvable:$true] %s160
          %166 = dma.hbm_to_vmem [thread:$0]  %s159, 512, %s161, %s149, 256, 256, 16
        $region28: #{tpu_custom_call.1} parent=23 // pred_fallthru
          _
      $region24: #{tpu_custom_call.1} parent=5 // pred_fallthru
        _
      %p167 = scmp.le.s32.totalorder 1, %s16
      %p168 = scmp.lt.s32.totalorder %s16, 5
      %p169 = pnand %p167, %p168
      %p170 = pneg %p169
      // Predicated region
      $region29: #{tpu_custom_call.1} parent=5 // pred_check
        _
      $region30: #{tpu_custom_call.1} parent=5 // pred_check_branch
        %172 = sbr.rel (%p169) target = $region32
      $region31: #{tpu_custom_call.1} parent=5 // pred_region
        %s173 = ssub.s32 %s16, 1
        %s174 = sand.u32 %s29, 1
        %s175 = scalar_lea.sflag [#allocation3], %s174
        %s176 = sand.u32 %s29, 1
        %s177 = smul.addr %s176, 32
        %s178 = scalar_lea.vmem [#allocation2], %s177
        // Predicated region
        $region33: #{tpu_custom_call.1} parent=31 // pred_check
          %p179 = pneg %p42
        $region34: #{tpu_custom_call.1} parent=31 // pred_check_branch
          %181 = sbr.rel (%p179) target = $region36
        $region35: #{tpu_custom_call.1} parent=31 // pred_region
          %182 = dma.done %s175, 512
        $region36: #{tpu_custom_call.1} parent=31 // pred_fallthru
          _
        // Predicated region
        $region37: #{tpu_custom_call.1} parent=31 // pred_check
          %p183 = pneg %p63
        $region38: #{tpu_custom_call.1} parent=31 // pred_check_branch
          %185 = sbr.rel (%p183) target = $region40
        $region39: #{tpu_custom_call.1} parent=31 // pred_region
          %186 = dma.done [#allocation6], 4096
        $region40: #{tpu_custom_call.1} parent=31 // pred_fallthru
          _
        %s187 = sand.u32 %s29, 1
        %s188 = scalar_lea.sflag [#allocation3], %s187
        %s189 = sand.u32 %s29, 1
        %s190 = smul.addr %s189, 32
        %s191 = scalar_lea.vmem [#allocation2], %s190
        %p192 = pneg %p42
        %p193 = pneg %p39
        %p194 = pneg %p63
        %p195 = pneg %p60
        %p196 = pneg %p84
        %p197 = pneg %p81
        %p198 = pneg %p110
        %p199 = pneg %p107
        %s200 = sand.u32 %s97, 1
        %s201 = scalar_lea.sflag [#allocation4], %s200
        %s202 = sand.u32 %s97, 1
        %s203 = smul.addr %s202, 16
        %s204 = scalar_lea.vmem [#allocation7], %s203
        %s205 = smul.u32 2, %s21
        %s206 = smul.u32 2, %s21
        %v207 = vld [vmem:[%s178] sm:$0xff]
        %v208 = vld [vmem:[%s178 + $0x8] sm:$0xff]
        %v209 = vld [vmem:[%s178 + $0x10] sm:$0xff]
        %v210 = vld [vmem:[%s178 + $0x18] sm:$0xff]
        %v211 = vld [vmem:[#allocation5] sm:$0xff]
        %v212 = vld [vmem:[#allocation5 + $0x8] sm:$0xff]
        %v213 = vld [vmem:[#allocation5 + $0x10] sm:$0xff]
        %v214 = vld [vmem:[#allocation5 + $0x18] sm:$0xff]
        %v215 = vld [vmem:[#allocation5 + $0x20] sm:$0xff]
        %v216 = vld [vmem:[#allocation5 + $0x28] sm:$0xff]
        %v217 = vld [vmem:[#allocation5 + $0x30] sm:$0xff]
        %v218 = vld [vmem:[#allocation5 + $0x38] sm:$0xff]
        %v219 = vld [vmem:[#allocation5 + $0x40] sm:$0xff]
        %v220 = vld [vmem:[#allocation5 + $0x48] sm:$0xff]
        %v221 = vld [vmem:[#allocation5 + $0x50] sm:$0xff]
        %v222 = vld [vmem:[#allocation5 + $0x58] sm:$0xff]
        %v223 = vld [vmem:[#allocation5 + $0x60] sm:$0xff]
        %v224 = vld [vmem:[#allocation5 + $0x68] sm:$0xff]
        %v225 = vld [vmem:[#allocation5 + $0x70] sm:$0xff]
        %v226 = vld [vmem:[#allocation5 + $0x78] sm:$0xff]
        %v227 = vld [vmem:[#allocation5 + $0x80] sm:$0xff]
        %v228 = vld [vmem:[#allocation5 + $0x88] sm:$0xff]
        %v229 = vld [vmem:[#allocation5 + $0x90] sm:$0xff]
        %v230 = vld [vmem:[#allocation5 + $0x98] sm:$0xff]
        %v231 = vld [vmem:[#allocation5 + $0xa0] sm:$0xff]
        %v232 = vld [vmem:[#allocation5 + $0xa8] sm:$0xff]
        %v233 = vld [vmem:[#allocation5 + $0xb0] sm:$0xff]
        %v234 = vld [vmem:[#allocation5 + $0xb8] sm:$0xff]
        %v235 = vld [vmem:[#allocation5 + $0xc0] sm:$0xff]
        %v236 = vld [vmem:[#allocation5 + $0xc8] sm:$0xff]
        %v237 = vld [vmem:[#allocation5 + $0xd0] sm:$0xff]
        %v238 = vld [vmem:[#allocation5 + $0xd8] sm:$0xff]
        %v239 = vld [vmem:[#allocation5 + $0xe0] sm:$0xff]
        %v240 = vld [vmem:[#allocation5 + $0xe8] sm:$0xff]
        %v241 = vld [vmem:[#allocation5 + $0xf0] sm:$0xff]
        %v242 = vld [vmem:[#allocation5 + $0xf8] sm:$0xff]
        %v243 = vld [vmem:[%s2] sm:$0x1]
        %v245 = vlaneseq
        %v246 = vshrl.u32 %v245, 7
        %v247 = vsub.s32 0, %v246
        %v248 = vrot.slane %v243, %v247
        %250 = vmatprep.subr.mxu0 0.0
        %251 = vmatpush1.msra.mxu0 %v211
        %252 = vmatprep.subr.mxu0 0.0
        %253 = vmatpush1.msra.mxu0 %v212
        %254 = vmatprep.subr.mxu0 0.0
        %255 = vmatpush1.msra.mxu0 %v213
        %256 = vmatprep.subr.mxu0 0.0
        %257 = vmatpush1.msra.mxu0 %v214
        %258 = vmatprep.subr.mxu0 0.0
        %259 = vmatpush1.msra.mxu0 %v215
        %260 = vmatprep.subr.mxu0 0.0
        %261 = vmatpush1.msra.mxu0 %v216
        %262 = vmatprep.subr.mxu0 0.0
        %263 = vmatpush1.msra.mxu0 %v217
        %264 = vmatprep.subr.mxu0 0.0
        %265 = vmatpush1.msra.mxu0 %v218
        %266 = vmatprep.subr.mxu0 0.0
        %267 = vmatpush1.msra.mxu0 %v219
        %268 = vmatprep.subr.mxu0 0.0
        %269 = vmatpush1.msra.mxu0 %v220
        %270 = vmatprep.subr.mxu0 0.0
        %271 = vmatpush1.msra.mxu0 %v221
        %272 = vmatprep.subr.mxu0 0.0
        %273 = vmatpush1.msra.mxu0 %v222
        %274 = vmatprep.subr.mxu0 0.0
        %275 = vmatpush1.msra.mxu0 %v223
        %276 = vmatprep.subr.mxu0 0.0
        %277 = vmatpush1.msra.mxu0 %v224
        %278 = vmatprep.subr.mxu0 0.0
        %279 = vmatpush1.msra.mxu0 %v225
        %280 = vmatprep.subr.mxu0 0.0
        %281 = vmatpush1.msra.mxu0 %v226
        %282 = vmatprep.subr.mxu0 0.0
        %283 = vmatpush1.msra.mxu0 %v227
        %284 = vmatprep.subr.mxu0 0.0
        %285 = vmatpush1.msra.mxu0 %v228
        %286 = vmatprep.subr.mxu0 0.0
        %287 = vmatpush1.msra.mxu0 %v229
        %288 = vmatprep.subr.mxu0 0.0
        %289 = vmatpush1.msra.mxu0 %v230
        %290 = vmatprep.subr.mxu0 0.0
        %291 = vmatpush1.msra.mxu0 %v231
        %292 = vmatprep.subr.mxu0 0.0
        %293 = vmatpush1.msra.mxu0 %v232
        %294 = vmatprep.subr.mxu0 0.0
        %295 = vmatpush1.msra.mxu0 %v233
        %296 = vmatprep.subr.mxu0 0.0
        %297 = vmatpush1.msra.mxu0 %v234
        %298 = vmatprep.subr.mxu0 0.0
        %299 = vmatpush1.msra.mxu0 %v235
        %300 = vmatprep.subr.mxu0 0.0
        %301 = vmatpush1.msra.mxu0 %v236
        %302 = vmatprep.subr.mxu0 0.0
        %303 = vmatpush1.msra.mxu0 %v237
        %304 = vmatprep.subr.mxu0 0.0
        %305 = vmatpush1.msra.mxu0 %v238
        %306 = vmatprep.subr.mxu0 0.0
        %307 = vmatpush1.msra.mxu0 %v239
        %308 = vmatprep.subr.mxu0 0.0
        %309 = vmatpush1.msra.mxu0 %v240
        %310 = vmatprep.subr.mxu0 0.0
        %311 = vmatpush1.msra.mxu0 %v241
        %312 = vmatprep.subr.mxu0 0.0
        %313 = vmatpush1.msra.mxu0 %v242
        %314 = vmatprep.mubr.f32.mxu0 %v208
        %315 = vmatmul.mubr.f32.gmra.mrb[0].mxu0 %v207
        %v316 = vpop.f32.mrb[0].mxu0
        %v317 = vadd.f32 %v248, %v316
        %v318 = vpop.f32.mrb[0].mxu0
        %319 = vmatprep.mubr.f32.mxu0 %v210
        %320 = vmatmul.mubr.f32.gmra.mrb[0].mxu0 %v209
        %v321 = vpop.f32.mrb[0].mxu0
        %v322 = vadd.f32 %v248, %v321
        %v323 = vpop.f32.mrb[0].mxu0
        %324 = vdwg.mxu0
        %325 = vst [vmem:[%s204] sm:$0xff] %v317
        %326 = vst [vmem:[%s204 + $0x8] sm:$0xff] %v322
        %s327 = sand.u32 %s97, 1
        %s328 = scalar_lea.sflag [#allocation4], %s327
        %s329 = sand.u32 %s97, 1
        %s330 = smul.addr %s329, 16
        %s331 = scalar_lea.vmem [#allocation7], %s330
        // Predicated region
        $region41: #{tpu_custom_call.1} parent=31 // pred_check
          %p332 = pneg %p107
        $region42: #{tpu_custom_call.1} parent=31 // pred_check_branch
          %334 = sbr.rel (%p332) target = $region44
        $region43: #{tpu_custom_call.1} parent=31 // pred_region
          %s335 = smul.u32 2, %s21
          %s337 = ssub.s32 256, 256
          %338 = vsyncadd %s328, %s337
          %s339 = smul.addr %s335, 128
          %s340 = scalar_lea.hbm %s3, %s339
          %s341 = sshll.u32 %s331, 4
          %s342 = int_to_ptr.vmem [resolvable:$true] %s341
          %347 = dma.vmem_to_hbm [thread:$0]  %s342, 256, %s340, %s328, 128, 128, 8
        $region44: #{tpu_custom_call.1} parent=31 // pred_fallthru
          _
      $region32: #{tpu_custom_call.1} parent=5 // pred_fallthru
        _
      %p348 = scmp.le.s32.totalorder 2, %s16
      // Predicated region
      $region45: #{tpu_custom_call.1} parent=5 // pred_check
        %p349 = pneg %p348
      $region46: #{tpu_custom_call.1} parent=5 // pred_check_branch
        %351 = sbr.rel (%p349) target = $region48
      $region47: #{tpu_custom_call.1} parent=5 // pred_region
        %s352 = ssub.s32 %s16, 2
        // Predicated region
        $region49: #{tpu_custom_call.1} parent=47 // pred_check
          %p353 = pneg %p113
        $region50: #{tpu_custom_call.1} parent=47 // pred_check_branch
          %355 = sbr.rel (%p353) target = $region52
        $region51: #{tpu_custom_call.1} parent=47 // pred_region
          %s356 = sand.u32 %s98, 1
          %s357 = scalar_lea.sflag [#allocation4], %s356
          %s358 = sand.u32 %s98, 1
          %s359 = smul.addr %s358, 16
          %s360 = scalar_lea.vmem [#allocation7], %s359
          %361 = dma.done %s357, 256
        $region52: #{tpu_custom_call.1} parent=47 // pred_fallthru
          _
      $region48: #{tpu_custom_call.1} parent=5 // pred_fallthru
        _
    $region6: #{tpu_custom_call.1} parent=1 // loop_footer
      %s20 = sadd.s32 1, %s16
    $region7: #{tpu_custom_call.1} parent=1 // loop_footer_branch
      %15 = sbr.rel target = $region3
    $region8: #{tpu_custom_call.1} parent=1 // loop_exit
      _
    %362 = vsyncpa [#allocation3], 1
    %s363 = scalar_lea.sflag [#allocation3], 1
    %364 = vsyncpa %s363, 1
    %365 = vsyncpa [#allocation6], 1
    %366 = vsyncpa [#allocation4], 1
    %s367 = scalar_lea.sflag [#allocation4], 1
    %368 = vsyncpa %s367, 1

// kernel: tpu_custom_call.1
$region0: #{tpu_custom_call.1}
  #allocation0 [shape = 'u32[]', space=smem, size = 0x4, offset = 0x4, fixed_abs, tag = 'smem constant byte address 0x4 - core index']
  #allocation1 [shape = 'u32[144,128]{1,0:T(1,128)}', space=vmem, size = 0x12000, scoped, tag = 'internal scratch']
  %s0 = inlined_call_operand.hbm [shape: f32[64,256], index: 0, kind: input, shape index: {}]
  %s1 = inlined_call_operand.hbm [shape: f32[256,128], index: 1, kind: input, shape index: {}]
  %s2 = inlined_call_operand.vmem [shape: f32[1,128], index: 2, kind: input, shape index: {}]
  %s3 = inlined_call_operand.hbm [shape: f32[64,128], index: 3, kind: output, shape index: {}]
  %s4 = sld [smem:[#allocation0]]
  $region53: #{tpu_custom_call.1} parent=0
    _
  %s6 = ssub.s32 1, %s4
  %s7 = scalar_select 0, %s6, %s4
  $region1: #{tpu_custom_call.1} parent=0
    #allocation2 [shape = 'u8[32768]{0}', space=vmem, size = 0x8000, scoped, tag = 'input window, operand 0']
    #allocation3 [shape = 's32[2]{0}', space=sflag, size = 0x8, scoped, tag = 'scoped memory for tpu_custom_call.1']
    #allocation4 [shape = 's32[2]{0}', space=sflag, size = 0x8, scoped, tag = 'scoped memory for tpu_custom_call.1']
    #allocation5 [shape = 'u8[131072]{0}', space=vmem, size = 0x20000, scoped, tag = 'input window, operand 1, single buffered']
    #allocation6 [shape = 's32[1]{0}', space=sflag, size = 0x4, scoped, tag = 'scoped memory for tpu_custom_call.1']
    #allocation7 [shape = 'u8[16384]{0}', space=vmem, size = 0x4000, scoped, tag = 'output window, operand 0']
    %8 = vsyncpa [#allocation3], 0
    %s9 = scalar_lea.sflag [#allocation3], 1
    %10 = vsyncpa %s9, 0
    %11 = vsyncpa [#allocation6], 0
    %12 = vsyncpa [#allocation4], 0
    %s13 = scalar_lea.sflag [#allocation4], 1
    %14 = vsyncpa %s13, 0
    loop: start=0, step=1, limit=6
    $region2: #{tpu_custom_call.1} parent=1 // loop_pre_header
      _
    $region3: #{tpu_custom_call.1} parent=1 // loop_header
      %s16 = sphi 0, %s20
      %p17 = scmp.ge.s32.totalorder %s16, 6
      %s26 = sphi 0, %s28
      %s29 = sphi 0, %s26
      %s30 = sphi 0, %s29
      %s46 = sphi 0, %s30
      %s50 = sphi 0, %s50
      %s52 = sphi 0, %s50
      %s53 = sphi 0, %s52
      %s67 = sphi 0, %s53
      %s71 = sphi 0, %s71
      %s73 = sphi 0, %s71
      %s74 = sphi 0, %s73
      %s88 = sphi 0, %s74
      %s94 = sphi 0, %s96
      %s97 = sphi 0, %s94
      %s98 = sphi 0, %s97
      %s114 = sphi 0, %s98
    $region4: #{tpu_custom_call.1} parent=1 // loop_header_branch
      %19 = sbr.rel (%p17) target = $region8
    $region5: #{tpu_custom_call.1} parent=1 // loop_body
      %s21 = ssub.s32 %s16, 1
      %s22 = ssub.s32 %s16, 2
      %s23 = sadd.s32 %s16, 1
      %s24 = ssub.s32 %s16, %s23
      %p25 = scmp.eq.s32.totalorder %s24, 0
      %s27 = sadd.s32 %s26, 1
      %s28 = scalar_select %p25, %s26, %s27
      %p31 = pneg %p25
      %p32 = scmp.eq.s32.totalorder %s16, 3
      %p33 = por %p31, %p32
      %p34 = scmp.ne.s32.totalorder %s26, %s29
      %p35 = scmp.eq.s32.totalorder %s16, 0
      %p36 = por %p34, %p35
      %p37 = scmp.ne.s32.totalorder %s26, %s29
      %p38 = scmp.eq.s32.totalorder %s21, 3
      %p39 = por %p37, %p38
      %p40 = scmp.ne.s32.totalorder %s29, %s30
      %p41 = scmp.eq.s32.totalorder %s21, 0
      %p42 = por %p40, %p41
      %p43 = scmp.ne.s32.totalorder %s29, %s30
      %p44 = scmp.eq.s32.totalorder %s22, 3
      %p45 = por %p43, %p44
      %p47 = scmp.ne.s32.totalorder %s30, %s46
      %p48 = scmp.eq.s32.totalorder %s22, 0
      %p49 = por %p47, %p48
      %s51 = sadd.s32 %s50, 1
      %p54 = scmp.eq.s32.totalorder %s16, 3
      %p55 = scmp.ne.s32.totalorder %s50, %s52
      %p56 = scmp.eq.s32.totalorder %s16, 0
      %p57 = por %p55, %p56
      %p58 = scmp.ne.s32.totalorder %s50, %s52
      %p59 = scmp.eq.s32.totalorder %s21, 3
      %p60 = por %p58, %p59
      %p61 = scmp.ne.s32.totalorder %s52, %s53
      %p62 = scmp.eq.s32.totalorder %s21, 0
      %p63 = por %p61, %p62
      %p64 = scmp.ne.s32.totalorder %s52, %s53
      %p65 = scmp.eq.s32.totalorder %s22, 3
      %p66 = por %p64, %p65
      %p68 = scmp.ne.s32.totalorder %s53, %s67
      %p69 = scmp.eq.s32.totalorder %s22, 0
      %p70 = por %p68, %p69
      %s72 = sadd.s32 %s71, 1
      %p75 = scmp.eq.s32.totalorder %s16, 3
      %p76 = scmp.ne.s32.totalorder %s71, %s73
      %p77 = scmp.eq.s32.totalorder %s16, 0
      %p78 = por %p76, %p77
      %p79 = scmp.ne.s32.totalorder %s71, %s73
      %p80 = scmp.eq.s32.totalorder %s21, 3
      %p81 = por %p79, %p80
      %p82 = scmp.ne.s32.totalorder %s73, %s74
      %p83 = scmp.eq.s32.totalorder %s21, 0
      %p84 = por %p82, %p83
      %p85 = scmp.ne.s32.totalorder %s73, %s74
      %p86 = scmp.eq.s32.totalorder %s22, 3
      %p87 = por %p85, %p86
      %p89 = scmp.ne.s32.totalorder %s74, %s88
      %p90 = scmp.eq.s32.totalorder %s22, 0
      %p91 = por %p89, %p90
      %s92 = ssub.s32 %s16, %s23
      %p93 = scmp.eq.s32.totalorder %s92, 0
      %s95 = sadd.s32 %s94, 1
      %s96 = scalar_select %p93, %s94, %s95
      %p99 = pneg %p93
      %p100 = scmp.eq.s32.totalorder %s16, 3
      %p101 = por %p99, %p100
      %p102 = scmp.ne.s32.totalorder %s94, %s97
      %p103 = scmp.eq.s32.totalorder %s16, 0
      %p104 = por %p102, %p103
      %p105 = scmp.ne.s32.totalorder %s94, %s97
      %p106 = scmp.eq.s32.totalorder %s21, 3
      %p107 = por %p105, %p106
      %p108 = scmp.ne.s32.totalorder %s97, %s98
      %p109 = scmp.eq.s32.totalorder %s21, 0
      %p110 = por %p108, %p109
      %p111 = scmp.ne.s32.totalorder %s97, %s98
      %p112 = scmp.eq.s32.totalorder %s22, 3
      %p113 = por %p111, %p112
      %p115 = scmp.ne.s32.totalorder %s98, %s114
      %p116 = scmp.eq.s32.totalorder %s22, 0
      %p117 = por %p115, %p116
      %p118 = scmp.le.s32.totalorder 1, %s16
      %p119 = scmp.lt.s32.totalorder %s16, 5
      %p120 = pnand %p118, %p119
      %p121 = pneg %p120
      // Predicated region
      $region9: #{tpu_custom_call.1} parent=5 // pred_check
        _
      $region10: #{tpu_custom_call.1} parent=5 // pred_check_branch
        %123 = sbr.rel (%p120) target = $region12
      $region11: #{tpu_custom_call.1} parent=5 // pred_region
        %s124 = ssub.s32 %s16, 1
        // Predicated region
        $region13: #{tpu_custom_call.1} parent=11 // pred_check
          %p125 = pneg %p63
        $region14: #{tpu_custom_call.1} parent=11 // pred_check_branch
          %127 = sbr.rel (%p125) target = $region16
        $region15: #{tpu_custom_call.1} parent=11 // pred_region
          %s129 = ssub.s32 4096, 4096
          %130 = vsyncadd [#allocation6], %s129
          %s131 = sshll.u32 [#allocation5], 4
          %s132 = int_to_ptr.vmem [resolvable:$true] %s131
          %137 = dma.hbm_to_vmem [thread:$0]  %s1, 4096, %s132, [#allocation6], 128, 128, 8
        $region16: #{tpu_custom_call.1} parent=11 // pred_fallthru
          _
        // Predicated region
        $region17: #{tpu_custom_call.1} parent=11 // pred_check
          %p138 = pneg %p84
        $region18: #{tpu_custom_call.1} parent=11 // pred_check_branch
          %140 = sbr.rel (%p138) target = $region20
        $region19: #{tpu_custom_call.1} parent=11 // pred_region
          _
        $region20: #{tpu_custom_call.1} parent=11 // pred_fallthru
          _
      $region12: #{tpu_custom_call.1} parent=5 // pred_fallthru
        _
      %p141 = scmp.lt.s32.totalorder %s16, 4
      // Predicated region
      $region21: #{tpu_custom_call.1} parent=5 // pred_check
        %p142 = pneg %p141
      $region22: #{tpu_custom_call.1} parent=5 // pred_check_branch
        %144 = sbr.rel (%p142) target = $region24
      $region23: #{tpu_custom_call.1} parent=5 // pred_region
        // Predicated region
        $region25: #{tpu_custom_call.1} parent=23 // pred_check
          %p145 = pneg %p36
        $region26: #{tpu_custom_call.1} parent=23 // pred_check_branch
          %147 = sbr.rel (%p145) target = $region28
        $region27: #{tpu_custom_call.1} parent=23 // pred_region
          %s148 = sand.u32 %s26, 1
          %s149 = scalar_lea.sflag [#allocation3], %s148
          %s150 = sand.u32 %s26, 1
          %s151 = smul.addr %s150, 32
          %s152 = scalar_lea.vmem [#allocation2], %s151
          %s153 = smul.u32 2, %s16
          %s155 = ssub.s32 512, 512
          %156 = vsyncadd %s149, %s155
          %s157 = smul.addr %s153, 2
          %s158 = smul.addr %s157, 128
          %s159 = scalar_lea.hbm %s0, %s158
          %s160 = sshll.u32 %s152, 4
          %s161 = int_to_ptr.vmem [resolvable:$true] %s160
          %166 = dma.hbm_to_vmem [thread:$0]  %s159, 512, %s161, %s149, 256, 256, 16
        $region28: #{tpu_custom_call.1} parent=23 // pred_fallthru
          _
      $region24: #{tpu_custom_call.1} parent=5 // pred_fallthru
        _
      %p167 = scmp.le.s32.totalorder 1, %s16
      %p168 = scmp.lt.s32.totalorder %s16, 5
      %p169 = pnand %p167, %p168
      %p170 = pneg %p169
      // Predicated region
      $region29: #{tpu_custom_call.1} parent=5 // pred_check
        _
      $region30: #{tpu_custom_call.1} parent=5 // pred_check_branch
        %172 = sbr.rel (%p169) target = $region32
      $region31: #{tpu_custom_call.1} parent=5 // pred_region
        %s173 = ssub.s32 %s16, 1
        %s174 = sand.u32 %s29, 1
        %s175 = scalar_lea.sflag [#allocation3], %s174
        %s176 = sand.u32 %s29, 1
        %s177 = smul.addr %s176, 32
        %s178 = scalar_lea.vmem [#allocation2], %s177
        // Predicated region
        $region33: #{tpu_custom_call.1} parent=31 // pred_check
          %p179 = pneg %p42
        $region34: #{tpu_custom_call.1} parent=31 // pred_check_branch
          %181 = sbr.rel (%p179) target = $region36
        $region35: #{tpu_custom_call.1} parent=31 // pred_region
          %182 = dma.done %s175, 512
        $region36: #{tpu_custom_call.1} parent=31 // pred_fallthru
          _
        // Predicated region
        $region37: #{tpu_custom_call.1} parent=31 // pred_check
          %p183 = pneg %p63
        $region38: #{tpu_custom_call.1} parent=31 // pred_check_branch
          %185 = sbr.rel (%p183) target = $region40
        $region39: #{tpu_custom_call.1} parent=31 // pred_region
          %186 = dma.done [#allocation6], 4096
        $region40: #{tpu_custom_call.1} parent=31 // pred_fallthru
          _
        %s187 = sand.u32 %s29, 1
        %s188 = scalar_lea.sflag [#allocation3], %s187
        %s189 = sand.u32 %s29, 1
        %s190 = smul.addr %s189, 32
        %s191 = scalar_lea.vmem [#allocation2], %s190
        %p192 = pneg %p42
        %p193 = pneg %p39
        %p194 = pneg %p63
        %p195 = pneg %p60
        %p196 = pneg %p84
        %p197 = pneg %p81
        %p198 = pneg %p110
        %p199 = pneg %p107
        %s200 = sand.u32 %s97, 1
        %s201 = scalar_lea.sflag [#allocation4], %s200
        %s202 = sand.u32 %s97, 1
        %s203 = smul.addr %s202, 16
        %s204 = scalar_lea.vmem [#allocation7], %s203
        %s205 = smul.u32 2, %s21
        %s206 = smul.u32 2, %s21
        %v207 = vld [vmem:[%s178] sm:$0xff]
        %v208 = vld [vmem:[%s178 + $0x8] sm:$0xff]
        %v209 = vld [vmem:[%s178 + $0x10] sm:$0xff]
        %v210 = vld [vmem:[%s178 + $0x18] sm:$0xff]
        %v211 = vld [vmem:[#allocation5] sm:$0xff]
        %v212 = vld [vmem:[#allocation5 + $0x8] sm:$0xff]
        %v213 = vld [vmem:[#allocation5 + $0x10] sm:$0xff]
        %v214 = vld [vmem:[#allocation5 + $0x18] sm:$0xff]
        %v215 = vld [vmem:[#allocation5 + $0x20] sm:$0xff]
        %v216 = vld [vmem:[#allocation5 + $0x28] sm:$0xff]
        %v217 = vld [vmem:[#allocation5 + $0x30] sm:$0xff]
        %v218 = vld [vmem:[#allocation5 + $0x38] sm:$0xff]
        %v219 = vld [vmem:[#allocation5 + $0x40] sm:$0xff]
        %v220 = vld [vmem:[#allocation5 + $0x48] sm:$0xff]
        %v221 = vld [vmem:[#allocation5 + $0x50] sm:$0xff]
        %v222 = vld [vmem:[#allocation5 + $0x58] sm:$0xff]
        %v223 = vld [vmem:[#allocation5 + $0x60] sm:$0xff]
        %v224 = vld [vmem:[#allocation5 + $0x68] sm:$0xff]
        %v225 = vld [vmem:[#allocation5 + $0x70] sm:$0xff]
        %v226 = vld [vmem:[#allocation5 + $0x78] sm:$0xff]
        %v227 = vld [vmem:[#allocation5 + $0x80] sm:$0xff]
        %v228 = vld [vmem:[#allocation5 + $0x88] sm:$0xff]
        %v229 = vld [vmem:[#allocation5 + $0x90] sm:$0xff]
        %v230 = vld [vmem:[#allocation5 + $0x98] sm:$0xff]
        %v231 = vld [vmem:[#allocation5 + $0xa0] sm:$0xff]
        %v232 = vld [vmem:[#allocation5 + $0xa8] sm:$0xff]
        %v233 = vld [vmem:[#allocation5 + $0xb0] sm:$0xff]
        %v234 = vld [vmem:[#allocation5 + $0xb8] sm:$0xff]
        %v235 = vld [vmem:[#allocation5 + $0xc0] sm:$0xff]
        %v236 = vld [vmem:[#allocation5 + $0xc8] sm:$0xff]
        %v237 = vld [vmem:[#allocation5 + $0xd0] sm:$0xff]
        %v238 = vld [vmem:[#allocation5 + $0xd8] sm:$0xff]
        %v239 = vld [vmem:[#allocation5 + $0xe0] sm:$0xff]
        %v240 = vld [vmem:[#allocation5 + $0xe8] sm:$0xff]
        %v241 = vld [vmem:[#allocation5 + $0xf0] sm:$0xff]
        %v242 = vld [vmem:[#allocation5 + $0xf8] sm:$0xff]
        %v243 = vld [vmem:[%s2] sm:$0x1]
        %v245 = vlaneseq
        %v246 = vshrl.u32 %v245, 7
        %v247 = vsub.s32 0, %v246
        %v248 = vrot.slane %v243, %v247
        %250 = vmatprep.subr.mxu0 0.0
        %251 = vmatpush1.msra.mxu0 %v211
        %252 = vmatprep.subr.mxu0 0.0
        %253 = vmatpush1.msra.mxu0 %v212
        %254 = vmatprep.subr.mxu0 0.0
        %255 = vmatpush1.msra.mxu0 %v213
        %256 = vmatprep.subr.mxu0 0.0
        %257 = vmatpush1.msra.mxu0 %v214
        %258 = vmatprep.subr.mxu0 0.0
        %259 = vmatpush1.msra.mxu0 %v215
        %260 = vmatprep.subr.mxu0 0.0
        %261 = vmatpush1.msra.mxu0 %v216
        %262 = vmatprep.subr.mxu0 0.0
        %263 = vmatpush1.msra.mxu0 %v217
        %264 = vmatprep.subr.mxu0 0.0
        %265 = vmatpush1.msra.mxu0 %v218
        %266 = vmatprep.subr.mxu0 0.0
        %267 = vmatpush1.msra.mxu0 %v219
        %268 = vmatprep.subr.mxu0 0.0
        %269 = vmatpush1.msra.mxu0 %v220
        %270 = vmatprep.subr.mxu0 0.0
        %271 = vmatpush1.msra.mxu0 %v221
        %272 = vmatprep.subr.mxu0 0.0
        %273 = vmatpush1.msra.mxu0 %v222
        %274 = vmatprep.subr.mxu0 0.0
        %275 = vmatpush1.msra.mxu0 %v223
        %276 = vmatprep.subr.mxu0 0.0
        %277 = vmatpush1.msra.mxu0 %v224
        %278 = vmatprep.subr.mxu0 0.0
        %279 = vmatpush1.msra.mxu0 %v225
        %280 = vmatprep.subr.mxu0 0.0
        %281 = vmatpush1.msra.mxu0 %v226
        %282 = vmatprep.subr.mxu0 0.0
        %283 = vmatpush1.msra.mxu0 %v227
        %284 = vmatprep.subr.mxu0 0.0
        %285 = vmatpush1.msra.mxu0 %v228
        %286 = vmatprep.subr.mxu0 0.0
        %287 = vmatpush1.msra.mxu0 %v229
        %288 = vmatprep.subr.mxu0 0.0
        %289 = vmatpush1.msra.mxu0 %v230
        %290 = vmatprep.subr.mxu0 0.0
        %291 = vmatpush1.msra.mxu0 %v231
        %292 = vmatprep.subr.mxu0 0.0
        %293 = vmatpush1.msra.mxu0 %v232
        %294 = vmatprep.subr.mxu0 0.0
        %295 = vmatpush1.msra.mxu0 %v233
        %296 = vmatprep.subr.mxu0 0.0
        %297 = vmatpush1.msra.mxu0 %v234
        %298 = vmatprep.subr.mxu0 0.0
        %299 = vmatpush1.msra.mxu0 %v235
        %300 = vmatprep.subr.mxu0 0.0
        %301 = vmatpush1.msra.mxu0 %v236
        %302 = vmatprep.subr.mxu0 0.0
        %303 = vmatpush1.msra.mxu0 %v237
        %304 = vmatprep.subr.mxu0 0.0
        %305 = vmatpush1.msra.mxu0 %v238
        %306 = vmatprep.subr.mxu0 0.0
        %307 = vmatpush1.msra.mxu0 %v239
        %308 = vmatprep.subr.mxu0 0.0
        %309 = vmatpush1.msra.mxu0 %v240
        %310 = vmatprep.subr.mxu0 0.0
        %311 = vmatpush1.msra.mxu0 %v241
        %312 = vmatprep.subr.mxu0 0.0
        %313 = vmatpush1.msra.mxu0 %v242
        %314 = vmatprep.mubr.f32.mxu0 %v208
        %315 = vmatmul.mubr.f32.gmra.mrb[0].mxu0 %v207
        %v316 = vpop.f32.mrb[0].mxu0
        %v317 = vadd.f32 %v248, %v316
        %v318 = vpop.f32.mrb[0].mxu0
        %319 = vmatprep.mubr.f32.mxu0 %v210
        %320 = vmatmul.mubr.f32.gmra.mrb[0].mxu0 %v209
        %v321 = vpop.f32.mrb[0].mxu0
        %v322 = vadd.f32 %v248, %v321
        %v323 = vpop.f32.mrb[0].mxu0
        %324 = vdwg.mxu0
        %325 = vst [vmem:[%s204] sm:$0xff] %v317
        %326 = vst [vmem:[%s204 + $0x8] sm:$0xff] %v322
        %s327 = sand.u32 %s97, 1
        %s328 = scalar_lea.sflag [#allocation4], %s327
        %s329 = sand.u32 %s97, 1
        %s330 = smul.addr %s329, 16
        %s331 = scalar_lea.vmem [#allocation7], %s330
        // Predicated region
        $region41: #{tpu_custom_call.1} parent=31 // pred_check
          %p332 = pneg %p107
        $region42: #{tpu_custom_call.1} parent=31 // pred_check_branch
          %334 = sbr.rel (%p332) target = $region44
        $region43: #{tpu_custom_call.1} parent=31 // pred_region
          %s335 = smul.u32 2, %s21
          %s337 = ssub.s32 256, 256
          %338 = vsyncadd %s328, %s337
          %s339 = smul.addr %s335, 128
          %s340 = scalar_lea.hbm %s3, %s339
          %s341 = sshll.u32 %s331, 4
          %s342 = int_to_ptr.vmem [resolvable:$true] %s341
          %347 = dma.vmem_to_hbm [thread:$0]  %s342, 256, %s340, %s328, 128, 128, 8
        $region44: #{tpu_custom_call.1} parent=31 // pred_fallthru
          _
      $region32: #{tpu_custom_call.1} parent=5 // pred_fallthru
        _
      %p348 = scmp.le.s32.totalorder 2, %s16
      // Predicated region
      $region45: #{tpu_custom_call.1} parent=5 // pred_check
        %p349 = pneg %p348
      $region46: #{tpu_custom_call.1} parent=5 // pred_check_branch
        %351 = sbr.rel (%p349) target = $region48
      $region47: #{tpu_custom_call.1} parent=5 // pred_region
        %s352 = ssub.s32 %s16, 2
        // Predicated region
        $region49: #{tpu_custom_call.1} parent=47 // pred_check
          %p353 = pneg %p113
        $region50: #{tpu_custom_call.1} parent=47 // pred_check_branch
          %355 = sbr.rel (%p353) target = $region52
        $region51: #{tpu_custom_call.1} parent=47 // pred_region
          %s356 = sand.u32 %s98, 1
          %s357 = scalar_lea.sflag [#allocation4], %s356
          %s358 = sand.u32 %s98, 1
          %s359 = smul.addr %s358, 16
          %s360 = scalar_lea.vmem [#allocation7], %s359
          %361 = dma.done %s357, 256
        $region52: #{tpu_custom_call.1} parent=47 // pred_fallthru
          _
      $region48: #{tpu_custom_call.1} parent=5 // pred_fallthru
        _
    $region6: #{tpu_custom_call.1} parent=1 // loop_footer
      %s20 = sadd.s32 1, %s16
    $region7: #{tpu_custom_call.1} parent=1 // loop_footer_branch
      %15 = sbr.rel target = $region3
    $region8: #{tpu_custom_call.1} parent=1 // loop_exit
      _
    %362 = vsyncpa [#allocation3], 1
    %s363 = scalar_lea.sflag [#allocation3], 1
    %364 = vsyncpa %s363, 1
    %365 = vsyncpa [#allocation6], 1
    %366 = vsyncpa [#allocation4], 1
    %s367 = scalar_lea.sflag [#allocation4], 1
    %368 = vsyncpa %s367, 1

</llo_original>
